<compile_context>
chip_gen: v7x
topology: tpu7x:2x2x1
jax: 0.10.0
libtpu: 0.0.40
codegen_flags: <defaults>
</compile_context>

<pallas_src>
import functools

import jax
import jax.numpy as jnp
from jax import lax
from jax.experimental import pallas as pl
from jax.experimental.pallas import tpu as pltpu


def _round_up(x: int, m: int) -> int:
    return (x + m - 1) // m * m


# --------------------------------------------------------------------------
# Fused lm-head + shifted cross-entropy kernel.
# Grid step (i, j):
#   x = hidden[i-tile] @ W[:, j-tile]   (bf16 MXU, f32 accumulate)
#   online logsumexp over the vocab (j) axis carried in VMEM scratch,
#   target logit gathered by comparing the global column index with the label.
# At the last j step the per-row loss (lse - tgt, 0 for ignore_index=-100)
# is written; the (N, V) logits never touch HBM.
# --------------------------------------------------------------------------
def _fused_lmhead_ce_kernel(h_ref, w_ref, lbl_ref, o_ref,
                            m_ref, l_ref, t_ref, *, v_actual, tn):
    j = pl.program_id(1)

    @pl.when(j == 0)
    def _init():
        m_ref[...] = jnp.full_like(m_ref, -1e30)
        l_ref[...] = jnp.zeros_like(l_ref)
        t_ref[...] = jnp.zeros_like(t_ref)

    # (tm, tn) logits tile on the MXU.
    x = jnp.dot(h_ref[...], w_ref[...], preferred_element_type=jnp.float32)

    # Global vocab column index of every lane in this tile (handles V padding
    # and keeps the label comparison correct under vocab tiling).
    col = j * tn + lax.broadcasted_iota(jnp.int32, x.shape, 1)
    in_vocab = col < v_actual
    lbl = lbl_ref[...]                                     # (tm, 1) int32

    # Online logsumexp update.
    m_prev = m_ref[...]
    x_masked = jnp.where(in_vocab, x, jnp.float32(-1e30))
    m_new = jnp.maximum(m_prev, jnp.max(x_masked, axis=-1, keepdims=True))
    p = jnp.where(in_vocab, jnp.exp(x - m_new), 0.0)       # exp on EUP, computed once
    l_ref[...] = l_ref[...] * jnp.exp(m_prev - m_new) + jnp.sum(p, axis=-1, keepdims=True)
    # Exactly one column across all j tiles matches a (non-negative) label.
    t_ref[...] = t_ref[...] + jnp.sum(jnp.where(col == lbl, x, 0.0),
                                      axis=-1, keepdims=True)
    m_ref[...] = m_new

    @pl.when(j == pl.num_programs(1) - 1)
    def _finalize():
        valid = lbl >= 0                                   # ignore_index = -100
        lse = m_ref[...] + jnp.log(l_ref[...])
        o_ref[...] = jnp.where(valid, lse - t_ref[...], 0.0)


def fused_lm_head_shifted_ce(hidden, w_head, labels, batch_size, *, tm=None, tn=None):
    """hidden (N, H), w_head (H, V), labels (N,) int32 with -100 = ignore.

    Returns scalar float32: sum(per-token CE) / batch_size.
    """
    N, H = hidden.shape
    H2, V = w_head.shape
    assert H2 == H

    if tm is None:
        tm = min(256, _round_up(N, 8))        # >=256 rows feeds the 256-deep MXU (v6e/v7x)
    if tn is None:
        tn = min(512, _round_up(V, 128))      # lane-dense vocab tiles
    n_pad = _round_up(N, tm)
    v_pad = _round_up(V, tn)

    # Pad once (cheap, activation-sized); padded rows get label -100 -> 0 loss,
    # padded vocab columns are masked inside the kernel.
    hid = jnp.zeros((n_pad, H), jnp.bfloat16).at[:N].set(hidden.astype(jnp.bfloat16))
    w = jnp.zeros((H, v_pad), jnp.bfloat16).at[:, :V].set(w_head.astype(jnp.bfloat16))
    lbl = jnp.full((n_pad, 1), -100, jnp.int32).at[:N, 0].set(labels.astype(jnp.int32))

    grid = (n_pad // tm, v_pad // tn)
    kernel = functools.partial(_fused_lmhead_ce_kernel, v_actual=V, tn=tn)

    per_row = pl.pallas_call(
        kernel,
        out_shape=jax.ShapeDtypeStruct((n_pad, 1), jnp.float32),
        grid_spec=pltpu.PrefetchScalarGridSpec(
            num_scalar_prefetch=0,
            grid=grid,
            in_specs=[
                pl.BlockSpec((tm, H), lambda i, j: (i, 0)),   # activations (full-H contraction)
                pl.BlockSpec((H, tn), lambda i, j: (0, j)),   # lm-head weight tile
                pl.BlockSpec((tm, 1), lambda i, j: (i, 0)),   # labels (revisited across j)
            ],
            out_specs=pl.BlockSpec((tm, 1), lambda i, j: (i, 0)),
            scratch_shapes=[pltpu.VMEM((tm, 1), jnp.float32),   # running max
                            pltpu.VMEM((tm, 1), jnp.float32),   # running sum-exp
                            pltpu.VMEM((tm, 1), jnp.float32)],  # target logit
        ),
        compiler_params=pltpu.CompilerParams(
            dimension_semantics=("parallel", "arbitrary"),
            vmem_limit_bytes=64 * 1024 * 1024,   # sized for v7x's 64 MiB VMEM
        ),
        cost_estimate=pl.CostEstimate(
            flops=2 * n_pad * H * v_pad,
            transcendentals=n_pad * v_pad,
            bytes_accessed=n_pad * H * 2 + H * v_pad * 2 + n_pad * 4 + n_pad * 4,
        ),
    )(hid, w, lbl)

    return jnp.sum(per_row) / jnp.float32(batch_size)


# --------------------------- Module-level wrapper ---------------------------

def prompt_forward(input_ids, loss_ids, emb_table, w_lm_head):
    """Forward pass with a deterministic synthetic PLM.

    input_ids : (B, S) int32
    loss_ids  : (B, S) int32  -- 1 at positions contributing to the loss
    emb_table : (V, H) float32
    w_lm_head : (H, V) float32
    returns scalar float32 loss
    """
    B, S = input_ids.shape
    V, H = emb_table.shape

    # Synthetic PLM body: embedding lookup (left to XLA's gather).
    hidden = emb_table[input_ids]                                # (B, S, H)

    # Shift expressed purely via labels: row (b, s) predicts input_ids[b, s+1]
    # iff loss_ids[b, s+1] > 0; last position and non-loss positions get -100.
    next_ids = jnp.roll(input_ids, shift=-1, axis=1)
    next_loss = jnp.roll(loss_ids, shift=-1, axis=1)
    not_last = (jnp.arange(S) < S - 1)[None, :]
    labels = jnp.where((next_loss > 0) & not_last, next_ids, -100)

    return fused_lm_head_shifted_ce(
        hidden.reshape(B * S, H),
        w_lm_head,
        labels.reshape(B * S),
        batch_size=B,
    )


# ---------------------------------- main ------------------------------------

if __name__ == "__main__":
    B, S, H, V = 2, 8, 32, 128

    key = jax.random.PRNGKey(0)
    k_emb, k_head, k_ids = jax.random.split(key, 3)

    emb_table = jax.random.normal(k_emb, (V, H), dtype=jnp.float32) * 0.02
    w_lm_head = jax.random.normal(k_head, (H, V), dtype=jnp.float32) * 0.02

    input_ids = jax.random.randint(k_ids, (B, S), 0, V, dtype=jnp.int32)
    loss_ids = jnp.zeros((B, S), dtype=jnp.int32).at[:, -3:].set(1)

    loss = jax.jit(prompt_forward)(input_ids, loss_ids, emb_table, w_lm_head)
    jax.block_until_ready(loss)

    # TODO(synk): the abstract template/verbalizer/tokenizer plumbing and the
    # generation decode loop are host-side control flow with no Pallas
    # equivalent; only the PLM-head + loss forward pass is implemented.
    print("KERNEL_OK")
</pallas_src>

<mosaic_0001>
module attributes {stable_mosaic.version = 11 : i64} {
  func.func @_fused_lmhead_ce_kernel(%arg0: i32, %arg1: i32, %arg2: memref<16x32xbf16, #tpu.memory_space<vmem>>, %arg3: memref<32x128xbf16, #tpu.memory_space<vmem>>, %arg4: memref<16x1xi32, #tpu.memory_space<vmem>>, %arg5: memref<16x1xf32, #tpu.memory_space<vmem>>, %arg6: memref<16x1xf32, #tpu.memory_space<vmem>>, %arg7: memref<16x1xf32, #tpu.memory_space<vmem>>, %arg8: memref<16x1xf32, #tpu.memory_space<vmem>>) attributes {dimension_semantics = [#tpu.dimension_semantics<parallel>, #tpu.dimension_semantics<arbitrary>], iteration_bounds = array<i64: 1, 1>, scalar_prefetch = 0 : i64, scratch_operands = 3 : i64, tpu.core_type = #tpu.core_type<tc>, window_params = [{transform_indices = @transform_0, window_bounds = array<i64: 16, 32>}, {transform_indices = @transform_1, window_bounds = array<i64: 32, 128>}, {transform_indices = @transform_2, window_bounds = array<i64: 16, 1>}, {transform_indices = @transform_3, window_bounds = array<i64: 16, 1>}]} {
    %c0_i32 = arith.constant 0 : i32
    %0 = arith.cmpi eq, %arg1, %c0_i32 : i32
    %1 = arith.extui %0 : i1 to i32
    %c0_i32_0 = arith.constant 0 : i32
    %2 = arith.cmpi ne, %1, %c0_i32_0 : i32
    scf.if %2 {
      %cst_27 = arith.constant -1.000000e+30 : f32
      %45 = vector.broadcast %cst_27 : f32 to vector<16x1xf32>
      %c0_28 = arith.constant 0 : index
      %c0_29 = arith.constant 0 : index
      %46 = vector.load %arg6[%c0_28, %c0_29] : memref<16x1xf32, #tpu.memory_space<vmem>>, vector<16x1xf32>
      tpu.vector_store %arg6[%c0_28, %c0_29], %45 {strides = array<i32>} : memref<16x1xf32, #tpu.memory_space<vmem>>, vector<16x1xf32>,
      %cst_30 = arith.constant 0.000000e+00 : f32
      %47 = vector.broadcast %cst_30 : f32 to vector<16x1xf32>
      %c0_31 = arith.constant 0 : index
      %c0_32 = arith.constant 0 : index
      %48 = vector.load %arg7[%c0_31, %c0_32] : memref<16x1xf32, #tpu.memory_space<vmem>>, vector<16x1xf32>
      tpu.vector_store %arg7[%c0_31, %c0_32], %47 {strides = array<i32>} : memref<16x1xf32, #tpu.memory_space<vmem>>, vector<16x1xf32>,
      %cst_33 = arith.constant 0.000000e+00 : f32
      %49 = vector.broadcast %cst_33 : f32 to vector<16x1xf32>
      %c0_34 = arith.constant 0 : index
      %c0_35 = arith.constant 0 : index
      %50 = vector.load %arg8[%c0_34, %c0_35] : memref<16x1xf32, #tpu.memory_space<vmem>>, vector<16x1xf32>
      tpu.vector_store %arg8[%c0_34, %c0_35], %49 {strides = array<i32>} : memref<16x1xf32, #tpu.memory_space<vmem>>, vector<16x1xf32>,
    } else {
    }
    %c0 = arith.constant 0 : index
    %c0_1 = arith.constant 0 : index
    %3 = vector.load %arg2[%c0, %c0_1] : memref<16x32xbf16, #tpu.memory_space<vmem>>, vector<16x32xbf16>
    %c0_2 = arith.constant 0 : index
    %c0_3 = arith.constant 0 : index
    %4 = vector.load %arg3[%c0_2, %c0_3] : memref<32x128xbf16, #tpu.memory_space<vmem>>, vector<32x128xbf16>
    %cst = arith.constant dense<0.000000e+00> : vector<16x128xf32>
    %5 = tpu.matmul %3, %4, %cst {dimension_numbers = #tpu.dot_dimension_numbers<[1], [0], [0], [1], [0, 0, 1, 1], [], []>} : vector<16x32xbf16>, vector<32x128xbf16>, vector<16x128xf32> -> vector<16x128xf32>
    %c128_i32 = arith.constant 128 : i32
    %6 = arith.muli %arg1, %c128_i32 : i32
    %7 = tpu.iota {dimensions = array<i32: 1>} : vector<16x128xi32>
    %8 = vector.broadcast %6 : i32 to vector<16x128xi32>
    %9 = arith.addi %8, %7 : vector<16x128xi32>
    %c128_i32_4 = arith.constant 128 : i32
    %10 = vector.broadcast %c128_i32_4 : i32 to vector<16x128xi32>
    %11 = arith.cmpi slt, %9, %10 : vector<16x128xi32>
    %c0_5 = arith.constant 0 : index
    %c0_6 = arith.constant 0 : index
    %12 = vector.load %arg4[%c0_5, %c0_6] : memref<16x1xi32, #tpu.memory_space<vmem>>, vector<16x1xi32>
    %c0_7 = arith.constant 0 : index
    %c0_8 = arith.constant 0 : index
    %13 = vector.load %arg6[%c0_7, %c0_8] : memref<16x1xf32, #tpu.memory_space<vmem>>, vector<16x1xf32>
    %cst_9 = arith.constant -1.000000e+30 : f32
    %14 = vector.broadcast %cst_9 : f32 to vector<16x128xf32>
    %15 = arith.select %11, %5, %14 : vector<16x128xi1>, vector<16x128xf32>
    %cst_10 = arith.constant dense<0xFF800000> : vector<16xf32>
    %16 = vector.multi_reduction <maximumf>, %15, %cst_10 [1] : vector<16x128xf32> to vector<16xf32>
    %17 = vector.shape_cast %16 : vector<16xf32> to vector<16x1xf32>
    %18 = arith.maximumf %13, %17 : vector<16x1xf32>
    %19 = vector.broadcast %18 : vector<16x1xf32> to vector<16x128xf32>
    %20 = arith.subf %5, %19 : vector<16x128xf32>
    %21 = math.exp %20 : vector<16x128xf32>
    %cst_11 = arith.constant 0.000000e+00 : f32
    %22 = vector.broadcast %cst_11 : f32 to vector<16x128xf32>
    %23 = arith.select %11, %21, %22 : vector<16x128xi1>, vector<16x128xf32>
    %c0_12 = arith.constant 0 : index
    %c0_13 = arith.constant 0 : index
    %24 = vector.load %arg7[%c0_12, %c0_13] : memref<16x1xf32, #tpu.memory_space<vmem>>, vector<16x1xf32>
    %25 = arith.subf %13, %18 : vector<16x1xf32>
    %26 = math.exp %25 : vector<16x1xf32>
    %27 = arith.mulf %24, %26 : vector<16x1xf32>
    %cst_14 = arith.constant dense<0.000000e+00> : vector<16xf32>
    %28 = vector.multi_reduction <add>, %23, %cst_14 [1] : vector<16x128xf32> to vector<16xf32>
    %29 = vector.shape_cast %28 : vector<16xf32> to vector<16x1xf32>
    %30 = arith.addf %27, %29 : vector<16x1xf32>
    %c0_15 = arith.constant 0 : index
    %c0_16 = arith.constant 0 : index
    %31 = vector.load %arg7[%c0_15, %c0_16] : memref<16x1xf32, #tpu.memory_space<vmem>>, vector<16x1xf32>
    tpu.vector_store %arg7[%c0_15, %c0_16], %30 {strides = array<i32>} : memref<16x1xf32, #tpu.memory_space<vmem>>, vector<16x1xf32>,
    %c0_17 = arith.constant 0 : index
    %c0_18 = arith.constant 0 : index
    %32 = vector.load %arg8[%c0_17, %c0_18] : memref<16x1xf32, #tpu.memory_space<vmem>>, vector<16x1xf32>
    %33 = vector.broadcast %12 : vector<16x1xi32> to vector<16x128xi32>
    %34 = arith.cmpi eq, %9, %33 : vector<16x128xi32>
    %cst_19 = arith.constant 0.000000e+00 : f32
    %35 = vector.broadcast %cst_19 : f32 to vector<16x128xf32>
    %36 = arith.select %34, %5, %35 : vector<16x128xi1>, vector<16x128xf32>
    %cst_20 = arith.constant dense<0.000000e+00> : vector<16xf32>
    %37 = vector.multi_reduction <add>, %36, %cst_20 [1] : vector<16x128xf32> to vector<16xf32>
    %38 = vector.shape_cast %37 : vector<16xf32> to vector<16x1xf32>
    %39 = arith.addf %32, %38 : vector<16x1xf32>
    %c0_21 = arith.constant 0 : index
    %c0_22 = arith.constant 0 : index
    %40 = vector.load %arg8[%c0_21, %c0_22] : memref<16x1xf32, #tpu.memory_space<vmem>>, vector<16x1xf32>
    tpu.vector_store %arg8[%c0_21, %c0_22], %39 {strides = array<i32>} : memref<16x1xf32, #tpu.memory_space<vmem>>, vector<16x1xf32>,
    %c0_23 = arith.constant 0 : index
    %c0_24 = arith.constant 0 : index
    %41 = vector.load %arg6[%c0_23, %c0_24] : memref<16x1xf32, #tpu.memory_space<vmem>>, vector<16x1xf32>
    tpu.vector_store %arg6[%c0_23, %c0_24], %18 {strides = array<i32>} : memref<16x1xf32, #tpu.memory_space<vmem>>, vector<16x1xf32>,
    %c0_i32_25 = arith.constant 0 : i32
    %42 = arith.cmpi eq, %arg1, %c0_i32_25 : i32
    %43 = arith.extui %42 : i1 to i32
    %c0_i32_26 = arith.constant 0 : i32
    %44 = arith.cmpi ne, %43, %c0_i32_26 : i32
    scf.if %44 {
      %c0_i32_27 = arith.constant 0 : i32
      %45 = vector.broadcast %c0_i32_27 : i32 to vector<16x1xi32>
      %46 = arith.cmpi sge, %12, %45 : vector<16x1xi32>
      %c0_28 = arith.constant 0 : index
      %c0_29 = arith.constant 0 : index
      %47 = vector.load %arg6[%c0_28, %c0_29] : memref<16x1xf32, #tpu.memory_space<vmem>>, vector<16x1xf32>
      %c0_30 = arith.constant 0 : index
      %c0_31 = arith.constant 0 : index
      %48 = vector.load %arg7[%c0_30, %c0_31] : memref<16x1xf32, #tpu.memory_space<vmem>>, vector<16x1xf32>
      %49 = math.log %48 : vector<16x1xf32>
      %50 = arith.addf %47, %49 : vector<16x1xf32>
      %c0_32 = arith.constant 0 : index
      %c0_33 = arith.constant 0 : index
      %51 = vector.load %arg8[%c0_32, %c0_33] : memref<16x1xf32, #tpu.memory_space<vmem>>, vector<16x1xf32>
      %52 = arith.subf %50, %51 : vector<16x1xf32>
      %cst_34 = arith.constant 0.000000e+00 : f32
      %53 = vector.broadcast %cst_34 : f32 to vector<16x1xf32>
      %54 = arith.select %46, %52, %53 : vector<16x1xi1>, vector<16x1xf32>
      %c0_35 = arith.constant 0 : index
      %c0_36 = arith.constant 0 : index
      %55 = vector.load %arg5[%c0_35, %c0_36] : memref<16x1xf32, #tpu.memory_space<vmem>>, vector<16x1xf32>
      tpu.vector_store %arg5[%c0_35, %c0_36], %54 {strides = array<i32>} : memref<16x1xf32, #tpu.memory_space<vmem>>, vector<16x1xf32>,
    } else {
    }
    return
  }
  func.func @transform_0(%arg0: i32, %arg1: i32) -> (i32, i32) {
    %c0_i32 = arith.constant 0 : i32
    %c0_i32_0 = arith.constant 0 : i32
    return %arg0, %c0_i32 : i32, i32
  }
  func.func @transform_1(%arg0: i32, %arg1: i32) -> (i32, i32) {
    %c0_i32 = arith.constant 0 : i32
    %c0_i32_0 = arith.constant 0 : i32
    return %c0_i32, %arg1 : i32, i32
  }
  func.func @transform_2(%arg0: i32, %arg1: i32) -> (i32, i32) {
    %c0_i32 = arith.constant 0 : i32
    %c0_i32_0 = arith.constant 0 : i32
    return %arg0, %c0_i32 : i32, i32
  }
  func.func @transform_3(%arg0: i32, %arg1: i32) -> (i32, i32) {
    %c0_i32 = arith.constant 0 : i32
    %c0_i32_0 = arith.constant 0 : i32
    return %arg0, %c0_i32 : i32, i32
  }
}

</mosaic_0001>

<llo_original>
// kernel: prompt_forward.1
$region0: #{prompt_forward.1}
  #allocation0 [shape = 'u32[]', space=smem, size = 0x4, offset = 0x4, fixed_abs, tag = 'smem constant byte address 0x4 - core index']
  #allocation1 [shape = 'u32[144,128]{1,0:T(1,128)}', space=vmem, size = 0x12000, scoped, tag = 'internal scratch']
  #allocation2 [shape = 'f32[16,1]{1,0:T(8,128)}', space=vmem, size = 0x2000, scoped, tag = 'scratch operand']
  #allocation3 [shape = 'f32[16,1]{1,0:T(8,128)}', space=vmem, size = 0x2000, scoped, tag = 'scratch operand']
  #allocation4 [shape = 'f32[16,1]{1,0:T(8,128)}', space=vmem, size = 0x2000, scoped, tag = 'scratch operand']
  %s0 = inlined_call_operand.hbm [shape: bf16[16,32], index: 0, kind: input, shape index: {}]
  %s1 = inlined_call_operand.hbm [shape: bf16[32,128], index: 1, kind: input, shape index: {}]
  %s2 = inlined_call_operand.hbm [shape: s32[16,1], index: 2, kind: input, shape index: {}]
  %s3 = inlined_call_operand.hbm [shape: f32[16,1], index: 3, kind: output, shape index: {}]
  %s4 = sld [smem:[#allocation0]]
  $region42: #{prompt_forward.1} parent=0
    _
  %s6 = ssub.s32 1, %s4
  %s7 = scalar_select 0, %s6, %s4
  $region1: #{prompt_forward.1} parent=0
    #allocation5 [shape = 'u8[4096]{0}', space=vmem, size = 0x1000, scoped, tag = 'input window, operand 0, single buffered']
    #allocation6 [shape = 's32[1]{0}', space=sflag, size = 0x4, scoped, tag = 'scoped memory for prompt_forward.1']
    #allocation7 [shape = 's32[1]{0}', space=sflag, size = 0x4, scoped, tag = 'scoped memory for prompt_forward.1']
    #allocation8 [shape = 'u8[8192]{0}', space=vmem, size = 0x2000, scoped, tag = 'input window, operand 1, single buffered']
    #allocation9 [shape = 's32[1]{0}', space=sflag, size = 0x4, scoped, tag = 'scoped memory for prompt_forward.1']
    #allocation10 [shape = 'u8[8192]{0}', space=vmem, size = 0x2000, scoped, tag = 'input window, operand 2, single buffered']
    #allocation11 [shape = 'u8[8192]{0}', space=vmem, size = 0x2000, scoped, tag = 'output window, operand 0, single buffered']
    %8 = vsyncpa [#allocation6], 0
    %9 = vsyncpa [#allocation9], 0
    %10 = vsyncpa [#allocation7], 0
    // Predicated region
    $region2: #{prompt_forward.1} parent=1 // pred_check
      _
    $region3: #{prompt_forward.1} parent=1 // pred_check_branch
      %12 = sbr.rel (0) target = $region5
    $region4: #{prompt_forward.1} parent=1 // pred_region
      %s14 = ssub.s32 128, 128
      %15 = vsyncadd [#allocation6], %s14
      %s16 = sshll.u32 [#allocation5], 4
      %s17 = int_to_ptr.vmem [resolvable:$true] %s16
      %22 = dma.hbm_to_vmem [thread:$0]  %s0, 128, %s17, [#allocation6], 64, 64, 4
    $region5: #{prompt_forward.1} parent=1 // pred_fallthru
      _
    // Predicated region
    $region6: #{prompt_forward.1} parent=1 // pred_check
      _
    $region7: #{prompt_forward.1} parent=1 // pred_check_branch
      %24 = sbr.rel (0) target = $region9
    $region8: #{prompt_forward.1} parent=1 // pred_region
      %s26 = ssub.s32 256, 256
      %27 = vsyncadd [#allocation9], %s26
      %s28 = sshll.u32 [#allocation8], 4
      %s29 = int_to_ptr.vmem [resolvable:$true] %s28
      %34 = dma.hbm_to_vmem [thread:$0]  %s1, 256, %s29, [#allocation9], 64, 64, 4
    $region9: #{prompt_forward.1} parent=1 // pred_fallthru
      _
    // Predicated region
    $region10: #{prompt_forward.1} parent=1 // pred_check
      _
    $region11: #{prompt_forward.1} parent=1 // pred_check_branch
      %36 = sbr.rel (0) target = $region13
    $region12: #{prompt_forward.1} parent=1 // pred_region
      %s38 = ssub.s32 256, 256
      %39 = vsyncadd [#allocation9], %s38
      %s40 = sshll.u32 [#allocation10], 4
      %s41 = int_to_ptr.vmem [resolvable:$true] %s40
      %46 = dma.hbm_to_vmem [thread:$0]  %s2, 256, %s41, [#allocation9], 128, 128, 8
    $region13: #{prompt_forward.1} parent=1 // pred_fallthru
      _
    // Predicated region
    $region14: #{prompt_forward.1} parent=1 // pred_check
      _
    $region15: #{prompt_forward.1} parent=1 // pred_check_branch
      %48 = sbr.rel (0) target = $region17
    $region16: #{prompt_forward.1} parent=1 // pred_region
      %49 = dma.done [#allocation6], 128
    $region17: #{prompt_forward.1} parent=1 // pred_fallthru
      _
    // Predicated region
    $region18: #{prompt_forward.1} parent=1 // pred_check
      _
    $region19: #{prompt_forward.1} parent=1 // pred_check_branch
      %51 = sbr.rel (0) target = $region21
    $region20: #{prompt_forward.1} parent=1 // pred_region
      %52 = dma.done [#allocation9], 256
    $region21: #{prompt_forward.1} parent=1 // pred_fallthru
      _
    // Predicated region
    $region22: #{prompt_forward.1} parent=1 // pred_check
      _
    $region23: #{prompt_forward.1} parent=1 // pred_check_branch
      %54 = sbr.rel (0) target = $region25
    $region24: #{prompt_forward.1} parent=1 // pred_region
      %55 = dma.done [#allocation9], 256
    $region25: #{prompt_forward.1} parent=1 // pred_fallthru
      _
    %p57 = scmp.eq.s32.totalorder 0, 0
    // Predicated region
    $region26: #{prompt_forward.1} parent=1 // pred_check
      %p58 = pneg %p57
    $region27: #{prompt_forward.1} parent=1 // pred_check_branch
      %60 = sbr.rel (%p58) target = $region29
    $region28: #{prompt_forward.1} parent=1 // pred_region
      %vm61 = vcmask 7168
      %62 = vst.msk [vmem:[#allocation2] sm:$0xff] %vm61, -1e+30
      %63 = vst.msk [vmem:[#allocation2 + $0x8] sm:$0xff] %vm61, -1e+30
      %64 = vst.msk [vmem:[#allocation3] sm:$0xff] %vm61, 0.0
      %65 = vst.msk [vmem:[#allocation3 + $0x8] sm:$0xff] %vm61, 0.0
      %66 = vst.msk [vmem:[#allocation4] sm:$0xff] %vm61, 0.0
      %67 = vst.msk [vmem:[#allocation4 + $0x8] sm:$0xff] %vm61, 0.0
    $region29: #{prompt_forward.1} parent=1 // pred_fallthru
      _
    %v68 = vld [vmem:[#allocation5] sm:$0xf]
    %v69 = vld [vmem:[#allocation5 + $0x4] sm:$0xf]
    %v70 = vld [vmem:[#allocation8] sm:$0xf]
    %v71 = vld [vmem:[#allocation8 + $0x4] sm:$0xf]
    %v72 = vld [vmem:[#allocation8 + $0x8] sm:$0xf]
    %v73 = vld [vmem:[#allocation8 + $0xc] sm:$0xf]
    %v76 = vunpack.c.l.b16 %v68
    %v77 = vunpack.c.l.b16 %v69
    %v78 = vpack.c.b16 %v77, %v76
    %v83 = vunpack.c.l.b16 %v70
    %v84 = vunpack.c.l.b16 %v71
    %v85 = vunpack.c.l.b16 %v72
    %v86 = vunpack.c.l.b16 %v73
    %v87 = vpack.c.b16 %v84, %v83
    %v88 = vpack.c.b16 %v86, %v85
    %vm91 = vcmask 261120
    %v93 = vsel %vm91, %v78, 0
    %95 = vmatprep.subr.bf16.mxu0 0
    %96 = vmatpush1.bf16.msra.mxu0 %v87
    %97 = vmatprep.subr.bf16.mxu0 0
    %98 = vmatpush1.bf16.msra.mxu0 %v88
    %99 = vmatprep.subr.bf16.mxu0 0
    %100 = vmatpush1.bf16.msra.mxu0 0
    %101 = vmatprep.subr.bf16.mxu0 0
    %102 = vmatpush1.bf16.msra.mxu0 0
    %103 = vmatprep.subr.bf16.mxu0 0
    %104 = vmatpush1.bf16.msra.mxu0 0
    %105 = vmatprep.subr.bf16.mxu0 0
    %106 = vmatpush1.bf16.msra.mxu0 0
    %107 = vmatprep.subr.bf16.mxu0 0
    %108 = vmatpush1.bf16.msra.mxu0 0
    %109 = vmatprep.subr.bf16.mxu0 0
    %110 = vmatpush1.bf16.msra.mxu0 0
    %111 = vmatprep.subr.bf16.mxu0 0
    %112 = vmatpush1.bf16.msra.mxu0 0
    %113 = vmatprep.subr.bf16.mxu0 0
    %114 = vmatpush1.bf16.msra.mxu0 0
    %115 = vmatprep.subr.bf16.mxu0 0
    %116 = vmatpush1.bf16.msra.mxu0 0
    %117 = vmatprep.subr.bf16.mxu0 0
    %118 = vmatpush1.bf16.msra.mxu0 0
    %119 = vmatprep.subr.bf16.mxu0 0
    %120 = vmatpush1.bf16.msra.mxu0 0
    %121 = vmatprep.subr.bf16.mxu0 0
    %122 = vmatpush1.bf16.msra.mxu0 0
    %123 = vmatprep.subr.bf16.mxu0 0
    %124 = vmatpush1.bf16.msra.mxu0 0
    %125 = vmatprep.subr.bf16.mxu0 0
    %126 = vmatpush1.bf16.msra.mxu0 0
    %127 = vmatprep.mubr.bf16.mxu0 0
    %128 = vmatmul.mubr.bf16.gmra.mrb[0].mxu0 %v93
    %v129 = vpop.f32.mrb[0].mxu0
    %v130 = vadd.f32 0.0, %v129
    %v131 = vpop.f32.mrb[0].mxu0
    %v132 = vpop.f32.mrb[0].mxu0
    %v133 = vadd.f32 0.0, %v132
    %v134 = vpop.f32.mrb[0].mxu0
    %135 = vdwg.mxu0
    %s136 = smul.u32 0, 128
    %v137 = vlaneseq
    %v138 = vand.u32 %v137, 127
    %v139 = vstv %s136
    %v140 = vadd.s32 %v139, %v138
    %vm141 = vcmp.lt.s32.totalorder %v140, 128
    %v142 = vld [vmem:[#allocation10] sm:$0xff]
    %v143 = vld [vmem:[#allocation10 + $0x8] sm:$0xff]
    %v144 = vld [vmem:[#allocation2] sm:$0xff]
    %v145 = vld [vmem:[#allocation2 + $0x8] sm:$0xff]
    %v146 = vsel %vm141, %v130, -1e+30
    %v147 = vsel %vm141, %v133, -1e+30
    %148 = vmax.xlane.f32.xlu0 %v146
    %v149 = vpop.xlane.xlu0 %148
    %150 = vmax.xlane.f32.xlu0 %v147
    %v151 = vpop.xlane.xlu0 %150
    %v152 = vmax.f32 %v144, %v149
    %v153 = vmax.f32 %v145, %v151
    %155 = vset.pattern.permute.xlu0 0
    %156 = vperm.xlu0 %155, %v152
    %v157 = vpop.permute.xlu0 %156
    %160 = vset.pattern.permute.xlu0 0
    %161 = vperm.xlu0 %160, %v153
    %v162 = vpop.permute.xlu0 %161
    %v164 = vsub.f32 %v130, %v157
    %v165 = vsub.f32 %v133, %v162
    %v166 = vmul.f32 %v164, 1.442695
    %v167 = vpow.pop %v166
    %v168 = vmul.f32 %v165, 1.442695
    %v169 = vpow.pop %v168
    %v170 = vsel %vm141, %v167, 0.0
    %v171 = vsel %vm141, %v169, 0.0
    %v172 = vld [vmem:[#allocation3] sm:$0xff]
    %v173 = vld [vmem:[#allocation3 + $0x8] sm:$0xff]
    %v174 = vsub.f32 %v144, %v152
    %v175 = vsub.f32 %v145, %v153
    %v176 = vmul.f32 %v174, 1.442695
    %v177 = vpow.pop %v176
    %v178 = vmul.f32 %v175, 1.442695
    %v179 = vpow.pop %v178
    %v180 = vmul.f32 %v172, %v177
    %v181 = vmul.f32 %v173, %v179
    %182 = vadd.xlane.f32.xlu0 %v170
    %v183 = vpop.xlane.xlu0 %182
    %184 = vadd.xlane.f32.xlu0 %v171
    %v185 = vpop.xlane.xlu0 %184
    %v186 = vadd.f32 %v180, %v183
    %v187 = vadd.f32 %v181, %v185
    %vm188 = vcmask 7168
    %189 = vst.msk [vmem:[#allocation3] sm:$0xff] %vm188, %v186
    %190 = vst.msk [vmem:[#allocation3 + $0x8] sm:$0xff] %vm188, %v187
    %v191 = vld [vmem:[#allocation4] sm:$0xff]
    %v192 = vld [vmem:[#allocation4 + $0x8] sm:$0xff]
    %193 = vset.pattern.permute.xlu0 0
    %194 = vperm.xlu0 %193, %v142
    %v195 = vpop.permute.xlu0 %194
    %196 = vset.pattern.permute.xlu0 0
    %197 = vperm.xlu0 %196, %v143
    %v198 = vpop.permute.xlu0 %197
    %vm199 = vcmp.eq.s32.totalorder %v140, %v195
    %vm200 = vcmp.eq.s32.totalorder %v140, %v198
    %v201 = vsel %vm199, %v130, 0.0
    %v202 = vsel %vm200, %v133, 0.0
    %203 = vadd.xlane.f32.xlu0 %v201
    %v204 = vpop.xlane.xlu0 %203
    %205 = vadd.xlane.f32.xlu0 %v202
    %v206 = vpop.xlane.xlu0 %205
    %v207 = vadd.f32 %v191, %v204
    %v208 = vadd.f32 %v192, %v206
    %209 = vst.msk [vmem:[#allocation4] sm:$0xff] %vm188, %v207
    %210 = vst.msk [vmem:[#allocation4 + $0x8] sm:$0xff] %vm188, %v208
    %211 = vst.msk [vmem:[#allocation2] sm:$0xff] %vm188, %v152
    %212 = vst.msk [vmem:[#allocation2 + $0x8] sm:$0xff] %vm188, %v153
    // Predicated region
    $region30: #{prompt_forward.1} parent=1 // pred_check
      %p213 = pneg %p57
    $region31: #{prompt_forward.1} parent=1 // pred_check_branch
      %215 = sbr.rel (%p213) target = $region33
    $region32: #{prompt_forward.1} parent=1 // pred_region
      %vm216 = vcmp.ge.s32.totalorder %v142, 0
      %vm217 = vcmp.ge.s32.totalorder %v143, 0
      %v218 = vld [vmem:[#allocation2] sm:$0xff]
      %v219 = vld [vmem:[#allocation2 + $0x8] sm:$0xff]
      %v220 = vld [vmem:[#allocation3] sm:$0xff]
      %v221 = vld [vmem:[#allocation3 + $0x8] sm:$0xff]
      %v222 = vlog2.pop %v220
      %v223 = vmul.f32 %v222, 0.6931472
      %v224 = vlog2.pop %v221
      %v225 = vmul.f32 %v224, 0.6931472
      %v226 = vadd.f32 %v218, %v223
      %v227 = vadd.f32 %v219, %v225
      %v228 = vld [vmem:[#allocation4] sm:$0xff]
      %v229 = vld [vmem:[#allocation4 + $0x8] sm:$0xff]
      %v230 = vsub.f32 %v226, %v228
      %v231 = vsub.f32 %v227, %v229
      %v232 = vsel %vm216, %v230, 0.0
      %v233 = vsel %vm217, %v231, 0.0
      %234 = vst.msk [vmem:[#allocation11] sm:$0xff] %vm188, %v232
      %235 = vst.msk [vmem:[#allocation11 + $0x8] sm:$0xff] %vm188, %v233
    $region33: #{prompt_forward.1} parent=1 // pred_fallthru
      _
    // Predicated region
    $region34: #{prompt_forward.1} parent=1 // pred_check
      _
    $region35: #{prompt_forward.1} parent=1 // pred_check_branch
      %237 = sbr.rel (0) target = $region37
    $region36: #{prompt_forward.1} parent=1 // pred_region
      %s239 = ssub.s32 256, 256
      %240 = vsyncadd [#allocation7], %s239
      %s241 = sshll.u32 [#allocation11], 4
      %s242 = int_to_ptr.vmem [resolvable:$true] %s241
      %247 = dma.vmem_to_hbm [thread:$0]  %s242, 256, %s3, [#allocation7], 128, 128, 8
    $region37: #{prompt_forward.1} parent=1 // pred_fallthru
      _
    // Predicated region
    $region38: #{prompt_forward.1} parent=1 // pred_check
      _
    $region39: #{prompt_forward.1} parent=1 // pred_check_branch
      %249 = sbr.rel (0) target = $region41
    $region40: #{prompt_forward.1} parent=1 // pred_region
      %250 = dma.done [#allocation7], 256
    $region41: #{prompt_forward.1} parent=1 // pred_fallthru
      _
    %251 = vsyncpa [#allocation6], 1
    %252 = vsyncpa [#allocation9], 1
    %253 = vsyncpa [#allocation7], 1

</llo_original>
